<compile_context>
chip_gen: v7x
topology: tpu7x:2x2x1
jax: 0.10.0
libtpu: 0.0.40
codegen_flags: <defaults>
</compile_context>

<pallas_src>
import functools

import jax
import jax.numpy as jnp
from jax import lax
from jax.experimental import pallas as pl
from jax.experimental.pallas import tpu as pltpu


def _softplus(x):
    # Numerically stable softplus: max(x, 0) + log1p(exp(-|x|))
    return jnp.maximum(x, 0.0) + jnp.log1p(jnp.exp(-jnp.abs(x)))


def latent_encoder_kernel(x_ref, w1_ref, b1_ref, w2_ref, b2_ref, out_ref, *, d_lat):
    x = x_ref[...]                                                     # (tb, D_in) f32

    # Fused first layer: hidden = ReLU(x @ [w1m | w1s] + [b1m | b1s])  -> (tb, 2H)
    h = jnp.dot(x, w1_ref[...], preferred_element_type=jnp.float32) + b1_ref[...]
    h = jnp.maximum(h, 0.0)

    # Fused second layer with block-diagonal W2 -> (tb, 2*D_lat) = [mu_pre | sigma_pre]
    y = jnp.dot(h, w2_ref[...], preferred_element_type=jnp.float32) + b2_ref[...]

    # Softplus (+ eps) only on the sigma half (lanes >= d_lat); mu half passes through.
    col = lax.broadcasted_iota(jnp.int32, y.shape, dimension=1)
    sigma_half = _softplus(y) + 1e-8
    out = jnp.where(col >= d_lat, sigma_half, y)

    out_ref[...] = out.astype(out_ref.dtype)


def latent_encoder(x, params, *, tb=None):
    """x: (B, D_in) float32.  params: dict with separate mean/std net weights
    (w1m/b1m/w2m/b2m, w1s/b1s/w2s/b2s) in (in_features, out_features) layout."""
    B, D_in = x.shape
    H = params["w1m"].shape[1]
    D_lat = params["w2m"].shape[1]

    if tb is None:
        tb = min(B, 1024)          # collapse the grid at small B; cap tile for huge B
    assert B % tb == 0
    n_steps = B // tb

    H2 = 2 * H                      # fused hidden width (lane-dense 128 for H=64)
    L2 = 2 * D_lat                  # fused output width: [mu | sigma]

    # ---- Wrapper-side layout plumbing (tiny, one-time under jit) ----
    # Layer 1: concatenate along the output dimension.
    w1 = jnp.concatenate([params["w1m"], params["w1s"]], axis=1)        # (D_in, 2H)
    b1 = jnp.concatenate([params["b1m"], params["b1s"]], axis=1)        # (1, 2H)
    # Layer 2: exact-zero block-diagonal so the fused matmul is bit-equivalent.
    zeros = jnp.zeros((H, D_lat), jnp.float32)
    w2 = jnp.concatenate(
        [
            jnp.concatenate([params["w2m"], zeros], axis=1),            # rows 0:H
            jnp.concatenate([zeros, params["w2s"]], axis=1),            # rows H:2H
        ],
        axis=0,
    )                                                                    # (2H, 2*D_lat)
    b2 = jnp.concatenate([params["b2m"], params["b2s"]], axis=1)        # (1, 2*D_lat)

    def full(shape):
        return pl.BlockSpec(shape, lambda i: (0, 0))

    grid_spec = pltpu.PrefetchScalarGridSpec(
        num_scalar_prefetch=0,
        grid=(n_steps,),
        in_specs=[
            pl.BlockSpec((tb, D_in), lambda i: (i, 0)),                 # x tile
            full((D_in, H2)), full((1, H2)),                            # fused layer 1
            full((H2, L2)), full((1, L2)),                              # fused layer 2
        ],
        out_specs=pl.BlockSpec((tb, L2), lambda i: (i, 0)),
    )

    cost = pl.CostEstimate(
        flops=2 * B * D_in * H2 + 2 * B * H2 * L2,
        transcendentals=2 * B * L2,                                     # exp + log1p
        bytes_accessed=4 * (B * D_in + D_in * H2 + H2 + H2 * L2 + L2 + B * L2),
    )

    out = pl.pallas_call(
        functools.partial(latent_encoder_kernel, d_lat=D_lat),
        grid_spec=grid_spec,
        out_shape=jax.ShapeDtypeStruct((B, L2), jnp.float32),
        compiler_params=pltpu.CompilerParams(
            dimension_semantics=("arbitrary",) if n_steps == 1 else ("parallel",),
        ),
        cost_estimate=cost,
    )(x, w1, b1, w2, b2)

    mu = out[:, :D_lat]
    sigma = out[:, D_lat:]
    return mu, sigma


def make_params(key, d_in, hidden, d_lat):
    """Deterministic synthetic parameter init (PyTorch-Linear-like scale)."""
    ks = jax.random.split(key, 8)

    def lin(kw, kb, fan_in, fan_out):
        bound = 1.0 / jnp.sqrt(fan_in)
        w = jax.random.uniform(kw, (fan_in, fan_out), jnp.float32, -bound, bound)
        b = jax.random.uniform(kb, (1, fan_out), jnp.float32, -bound, bound)
        return w, b

    w1m, b1m = lin(ks[0], ks[1], d_in, hidden)
    w2m, b2m = lin(ks[2], ks[3], hidden, d_lat)
    w1s, b1s = lin(ks[4], ks[5], d_in, hidden)
    w2s, b2s = lin(ks[6], ks[7], hidden, d_lat)
    return dict(w1m=w1m, b1m=b1m, w2m=w2m, b2m=b2m,
                w1s=w1s, b1s=b1s, w2s=w2s, b2s=b2s)


def reference(x, p):
    """Pure-JAX reference of the same forward pass (un-fused)."""
    h_m = jnp.maximum(x @ p["w1m"] + p["b1m"], 0.0)
    mu = h_m @ p["w2m"] + p["b2m"]
    h_s = jnp.maximum(x @ p["w1s"] + p["b1s"], 0.0)
    sigma = jax.nn.softplus(h_s @ p["w2s"] + p["b2s"]) + 1e-8
    return mu, sigma


if __name__ == "__main__":
    # Small shapes consistent with the module:
    #   d_traits=4, d_obs=8, d_beliefs=4  -> input_dim = 16
    #   hidden = 64 (from make_net), d_het_latent = 8, batch = 16
    B, D_IN, HIDDEN, D_LAT = 16, 16, 64, 8

    key = jax.random.PRNGKey(0)
    kx, kp = jax.random.split(key)
    x = jax.random.normal(kx, (B, D_IN), jnp.float32)
    params = make_params(kp, D_IN, HIDDEN, D_LAT)

    mu, sigma = latent_encoder(x, params)
    mu, sigma = jax.block_until_ready(mu), jax.block_until_ready(sigma)

    mu_ref, sigma_ref = reference(x, params)
    assert jnp.allclose(mu, mu_ref, atol=1e-5, rtol=1e-5)
    assert jnp.allclose(sigma, sigma_ref, atol=1e-5, rtol=1e-5)
    assert bool(jnp.all(sigma > 0.0))

    print("KERNEL_OK")
</pallas_src>

<mosaic_0001>
module attributes {stable_mosaic.version = 11 : i64} {
  func.func @latent_encoder_kernel(%arg0: i32, %arg1: memref<16x16xf32, #tpu.memory_space<vmem>>, %arg2: memref<16x128xf32, #tpu.memory_space<vmem>>, %arg3: memref<1x128xf32, #tpu.memory_space<vmem>>, %arg4: memref<128x16xf32, #tpu.memory_space<vmem>>, %arg5: memref<1x16xf32, #tpu.memory_space<vmem>>, %arg6: memref<16x16xf32, #tpu.memory_space<vmem>>) attributes {dimension_semantics = [#tpu.dimension_semantics<arbitrary>], iteration_bounds = array<i64: 1>, scalar_prefetch = 0 : i64, scratch_operands = 0 : i64, tpu.core_type = #tpu.core_type<tc>, window_params = [{transform_indices = @transform_0, window_bounds = array<i64: 16, 16>}, {pipeline_mode = #tpu.pipeline_mode<synchronous>, transform_indices = @transform_1, window_bounds = array<i64: 16, 128>}, {pipeline_mode = #tpu.pipeline_mode<synchronous>, transform_indices = @transform_2, window_bounds = array<i64: 1, 128>}, {pipeline_mode = #tpu.pipeline_mode<synchronous>, transform_indices = @transform_3, window_bounds = array<i64: 128, 16>}, {pipeline_mode = #tpu.pipeline_mode<synchronous>, transform_indices = @transform_4, window_bounds = array<i64: 1, 16>}, {transform_indices = @transform_5, window_bounds = array<i64: 16, 16>}]} {
    %c0 = arith.constant 0 : index
    %c0_0 = arith.constant 0 : index
    %0 = vector.load %arg1[%c0, %c0_0] : memref<16x16xf32, #tpu.memory_space<vmem>>, vector<16x16xf32>
    %c0_1 = arith.constant 0 : index
    %c0_2 = arith.constant 0 : index
    %1 = vector.load %arg2[%c0_1, %c0_2] : memref<16x128xf32, #tpu.memory_space<vmem>>, vector<16x128xf32>
    %cst = arith.constant dense<0.000000e+00> : vector<16x128xf32>
    %2 = tpu.matmul %0, %1, %cst {dimension_numbers = #tpu.dot_dimension_numbers<[1], [0], [0], [1], [0, 0, 1, 1], [], []>} : vector<16x16xf32>, vector<16x128xf32>, vector<16x128xf32> -> vector<16x128xf32>
    %c0_3 = arith.constant 0 : index
    %c0_4 = arith.constant 0 : index
    %3 = vector.load %arg3[%c0_3, %c0_4] : memref<1x128xf32, #tpu.memory_space<vmem>>, vector<1x128xf32>
    %4 = vector.broadcast %3 : vector<1x128xf32> to vector<16x128xf32>
    %5 = arith.addf %2, %4 : vector<16x128xf32>
    %cst_5 = arith.constant 0.000000e+00 : f32
    %6 = vector.broadcast %cst_5 : f32 to vector<16x128xf32>
    %7 = arith.maximumf %5, %6 : vector<16x128xf32>
    %c0_6 = arith.constant 0 : index
    %c0_7 = arith.constant 0 : index
    %8 = vector.load %arg4[%c0_6, %c0_7] : memref<128x16xf32, #tpu.memory_space<vmem>>, vector<128x16xf32>
    %cst_8 = arith.constant dense<0.000000e+00> : vector<16x16xf32>
    %9 = tpu.matmul %7, %8, %cst_8 {dimension_numbers = #tpu.dot_dimension_numbers<[1], [0], [0], [1], [0, 0, 1, 1], [], []>} : vector<16x128xf32>, vector<128x16xf32>, vector<16x16xf32> -> vector<16x16xf32>
    %c0_9 = arith.constant 0 : index
    %c0_10 = arith.constant 0 : index
    %10 = vector.load %arg5[%c0_9, %c0_10] : memref<1x16xf32, #tpu.memory_space<vmem>>, vector<1x16xf32>
    %11 = vector.broadcast %10 : vector<1x16xf32> to vector<16x16xf32>
    %12 = arith.addf %9, %11 : vector<16x16xf32>
    %13 = tpu.iota {dimensions = array<i32: 1>} : vector<16x16xi32>
    %cst_11 = arith.constant 0.000000e+00 : f32
    %14 = vector.broadcast %cst_11 : f32 to vector<16x16xf32>
    %15 = arith.maximumf %12, %14 : vector<16x16xf32>
    %16 = math.absf %12 : vector<16x16xf32>
    %cst_12 = arith.constant 0.000000e+00 : f32
    %17 = vector.broadcast %cst_12 : f32 to vector<16x16xf32>
    %18 = arith.subf %17, %16 : vector<16x16xf32>
    %19 = math.exp %18 : vector<16x16xf32>
    %20 = math.log1p %19 : vector<16x16xf32>
    %21 = arith.addf %15, %20 : vector<16x16xf32>
    %cst_13 = arith.constant 9.99999993E-9 : f32
    %22 = vector.broadcast %cst_13 : f32 to vector<16x16xf32>
    %23 = arith.addf %21, %22 : vector<16x16xf32>
    %c8_i32 = arith.constant 8 : i32
    %24 = vector.broadcast %c8_i32 : i32 to vector<16x16xi32>
    %25 = arith.cmpi sge, %13, %24 : vector<16x16xi32>
    %26 = arith.select %25, %23, %12 : vector<16x16xi1>, vector<16x16xf32>
    %c0_14 = arith.constant 0 : index
    %c0_15 = arith.constant 0 : index
    %27 = vector.load %arg6[%c0_14, %c0_15] : memref<16x16xf32, #tpu.memory_space<vmem>>, vector<16x16xf32>
    tpu.vector_store %arg6[%c0_14, %c0_15], %26 {strides = array<i32>} : memref<16x16xf32, #tpu.memory_space<vmem>>, vector<16x16xf32>,
    return
  }
  func.func @transform_0(%arg0: i32) -> (i32, i32) {
    %c0_i32 = arith.constant 0 : i32
    %c0_i32_0 = arith.constant 0 : i32
    return %arg0, %c0_i32 : i32, i32
  }
  func.func @transform_1(%arg0: i32) -> (i32, i32) {
    %c0_i32 = arith.constant 0 : i32
    %c0_i32_0 = arith.constant 0 : i32
    %c0_i32_1 = arith.constant 0 : i32
    return %c0_i32, %c0_i32_0 : i32, i32
  }
  func.func @transform_2(%arg0: i32) -> (i32, i32) {
    %c0_i32 = arith.constant 0 : i32
    %c0_i32_0 = arith.constant 0 : i32
    %c0_i32_1 = arith.constant 0 : i32
    return %c0_i32, %c0_i32_0 : i32, i32
  }
  func.func @transform_3(%arg0: i32) -> (i32, i32) {
    %c0_i32 = arith.constant 0 : i32
    %c0_i32_0 = arith.constant 0 : i32
    %c0_i32_1 = arith.constant 0 : i32
    return %c0_i32, %c0_i32_0 : i32, i32
  }
  func.func @transform_4(%arg0: i32) -> (i32, i32) {
    %c0_i32 = arith.constant 0 : i32
    %c0_i32_0 = arith.constant 0 : i32
    %c0_i32_1 = arith.constant 0 : i32
    return %c0_i32, %c0_i32_0 : i32, i32
  }
  func.func @transform_5(%arg0: i32) -> (i32, i32) {
    %c0_i32 = arith.constant 0 : i32
    %c0_i32_0 = arith.constant 0 : i32
    return %arg0, %c0_i32 : i32, i32
  }
}

</mosaic_0001>

<llo_original>
// kernel: tpu_custom_call.1
$region0: #{tpu_custom_call.1}
  #allocation0 [shape = 'u32[]', space=smem, size = 0x4, offset = 0x4, fixed_abs, tag = 'smem constant byte address 0x4 - core index']
  #allocation1 [shape = 'u32[144,128]{1,0:T(1,128)}', space=vmem, size = 0x12000, scoped, tag = 'internal scratch']
  %s0 = inlined_call_operand.vmem [shape: f32[16,16], index: 0, kind: input, shape index: {}]
  %s1 = inlined_call_operand.vmem [shape: f32[16,128], index: 1, kind: input, shape index: {}]
  %s2 = inlined_call_operand.vmem [shape: f32[1,128], index: 2, kind: input, shape index: {}]
  %s3 = inlined_call_operand.vmem [shape: f32[128,16], index: 3, kind: input, shape index: {}]
  %s4 = inlined_call_operand.vmem [shape: f32[1,16], index: 4, kind: input, shape index: {}]
  %s5 = inlined_call_operand.hbm [shape: f32[16,16], index: 5, kind: output, shape index: {}]
  %s6 = sld [smem:[#allocation0]]
  $region30: #{tpu_custom_call.1} parent=0
    _
  %s8 = ssub.s32 1, %s6
  %s9 = scalar_select 0, %s8, %s6
  $region1: #{tpu_custom_call.1} parent=0
    #allocation2 [shape = 'u8[8192]{0}', space=vmem, size = 0x2000, scoped, tag = 'output window, operand 0, single buffered']
    #allocation3 [shape = 's32[1]{0}', space=sflag, size = 0x4, scoped, tag = 'scoped memory for tpu_custom_call.1']
    %10 = vsyncpa [#allocation3], 0
    // Predicated region
    $region2: #{tpu_custom_call.1} parent=1 // pred_check
      _
    $region3: #{tpu_custom_call.1} parent=1 // pred_check_branch
      %12 = sbr.rel (0) target = $region5
    $region4: #{tpu_custom_call.1} parent=1 // pred_region
      _
    $region5: #{tpu_custom_call.1} parent=1 // pred_fallthru
      _
    // Predicated region
    $region6: #{tpu_custom_call.1} parent=1 // pred_check
      _
    $region7: #{tpu_custom_call.1} parent=1 // pred_check_branch
      %14 = sbr.rel (0) target = $region9
    $region8: #{tpu_custom_call.1} parent=1 // pred_region
      _
    $region9: #{tpu_custom_call.1} parent=1 // pred_fallthru
      _
    // Predicated region
    $region10: #{tpu_custom_call.1} parent=1 // pred_check
      _
    $region11: #{tpu_custom_call.1} parent=1 // pred_check_branch
      %16 = sbr.rel (0) target = $region13
    $region12: #{tpu_custom_call.1} parent=1 // pred_region
      _
    $region13: #{tpu_custom_call.1} parent=1 // pred_fallthru
      _
    // Predicated region
    $region14: #{tpu_custom_call.1} parent=1 // pred_check
      _
    $region15: #{tpu_custom_call.1} parent=1 // pred_check_branch
      %18 = sbr.rel (0) target = $region17
    $region16: #{tpu_custom_call.1} parent=1 // pred_region
      _
    $region17: #{tpu_custom_call.1} parent=1 // pred_fallthru
      _
    // Predicated region
    $region18: #{tpu_custom_call.1} parent=1 // pred_check
      _
    $region19: #{tpu_custom_call.1} parent=1 // pred_check_branch
      %20 = sbr.rel (0) target = $region21
    $region20: #{tpu_custom_call.1} parent=1 // pred_region
      _
    $region21: #{tpu_custom_call.1} parent=1 // pred_fallthru
      _
    %v21 = vld [vmem:[%s0] sm:$0xff]
    %v22 = vld [vmem:[%s0 + $0x8] sm:$0xff]
    %v23 = vld [vmem:[%s1] sm:$0xff]
    %v24 = vld [vmem:[%s1 + $0x8] sm:$0xff]
    %v25 = vld [vmem:[%s2] sm:$0x1]
    %v27 = vlaneseq
    %v28 = vshrl.u32 %v27, 7
    %v29 = vsub.s32 0, %v28
    %v30 = vrot.slane %v25, %v29
    %vm32 = vcmask 130048
    %v34 = vsel %vm32, %v21, 0
    %v37 = vsel %vm32, %v22, 0
    %39 = vmatprep.subr.mxu0 0.0
    %40 = vmatpush1.msra.mxu0 %v23
    %41 = vmatprep.subr.mxu0 0.0
    %42 = vmatpush1.msra.mxu0 %v24
    %43 = vmatprep.subr.mxu0 0.0
    %44 = vmatpush1.msra.mxu0 0.0
    %45 = vmatprep.subr.mxu0 0.0
    %46 = vmatpush1.msra.mxu0 0.0
    %47 = vmatprep.subr.mxu0 0.0
    %48 = vmatpush1.msra.mxu0 0.0
    %49 = vmatprep.subr.mxu0 0.0
    %50 = vmatpush1.msra.mxu0 0.0
    %51 = vmatprep.subr.mxu0 0.0
    %52 = vmatpush1.msra.mxu0 0.0
    %53 = vmatprep.subr.mxu0 0.0
    %54 = vmatpush1.msra.mxu0 0.0
    %55 = vmatprep.subr.mxu0 0.0
    %56 = vmatpush1.msra.mxu0 0.0
    %57 = vmatprep.subr.mxu0 0.0
    %58 = vmatpush1.msra.mxu0 0.0
    %59 = vmatprep.subr.mxu0 0.0
    %60 = vmatpush1.msra.mxu0 0.0
    %61 = vmatprep.subr.mxu0 0.0
    %62 = vmatpush1.msra.mxu0 0.0
    %63 = vmatprep.subr.mxu0 0.0
    %64 = vmatpush1.msra.mxu0 0.0
    %65 = vmatprep.subr.mxu0 0.0
    %66 = vmatpush1.msra.mxu0 0.0
    %67 = vmatprep.subr.mxu0 0.0
    %68 = vmatpush1.msra.mxu0 0.0
    %69 = vmatprep.subr.mxu0 0.0
    %70 = vmatpush1.msra.mxu0 0.0
    %71 = vmatprep.subr.mxu0 0.0
    %72 = vmatpush1.msra.mxu0 0.0
    %73 = vmatprep.subr.mxu0 0.0
    %74 = vmatpush1.msra.mxu0 0.0
    %75 = vmatprep.subr.mxu0 0.0
    %76 = vmatpush1.msra.mxu0 0.0
    %77 = vmatprep.subr.mxu0 0.0
    %78 = vmatpush1.msra.mxu0 0.0
    %79 = vmatprep.subr.mxu0 0.0
    %80 = vmatpush1.msra.mxu0 0.0
    %81 = vmatprep.subr.mxu0 0.0
    %82 = vmatpush1.msra.mxu0 0.0
    %83 = vmatprep.subr.mxu0 0.0
    %84 = vmatpush1.msra.mxu0 0.0
    %85 = vmatprep.subr.mxu0 0.0
    %86 = vmatpush1.msra.mxu0 0.0
    %87 = vmatprep.subr.mxu0 0.0
    %88 = vmatpush1.msra.mxu0 0.0
    %89 = vmatprep.subr.mxu0 0.0
    %90 = vmatpush1.msra.mxu0 0.0
    %91 = vmatprep.subr.mxu0 0.0
    %92 = vmatpush1.msra.mxu0 0.0
    %93 = vmatprep.subr.mxu0 0.0
    %94 = vmatpush1.msra.mxu0 0.0
    %95 = vmatprep.subr.mxu0 0.0
    %96 = vmatpush1.msra.mxu0 0.0
    %97 = vmatprep.subr.mxu0 0.0
    %98 = vmatpush1.msra.mxu0 0.0
    %99 = vmatprep.subr.mxu0 0.0
    %100 = vmatpush1.msra.mxu0 0.0
    %101 = vmatprep.subr.mxu0 0.0
    %102 = vmatpush1.msra.mxu0 0.0
    %103 = vmatprep.mubr.f32.mxu0 0.0
    %104 = vmatmul.mubr.f32.gmra.mrb[0].mxu0 %v34
    %v105 = vpop.f32.mrb[0].mxu0
    %v106 = vadd.f32 %v30, %v105
    %v107 = vpop.f32.mrb[0].mxu0
    %108 = vmatprep.mubr.f32.mxu0 0.0
    %109 = vmatmul.mubr.f32.gmra.mrb[0].mxu0 %v37
    %v110 = vpop.f32.mrb[0].mxu0
    %v111 = vadd.f32 %v30, %v110
    %v112 = vpop.f32.mrb[0].mxu0
    %113 = vdwg.mxu0
    %v114 = vmax.f32 %v106, 0.0
    %v115 = vmax.f32 %v111, 0.0
    %v116 = vld [vmem:[%s3] sm:$0xff]
    %v117 = vld [vmem:[%s3 + $0x8] sm:$0xff]
    %v118 = vld [vmem:[%s3 + $0x10] sm:$0xff]
    %v119 = vld [vmem:[%s3 + $0x18] sm:$0xff]
    %v120 = vld [vmem:[%s3 + $0x20] sm:$0xff]
    %v121 = vld [vmem:[%s3 + $0x28] sm:$0xff]
    %v122 = vld [vmem:[%s3 + $0x30] sm:$0xff]
    %v123 = vld [vmem:[%s3 + $0x38] sm:$0xff]
    %v124 = vld [vmem:[%s3 + $0x40] sm:$0xff]
    %v125 = vld [vmem:[%s3 + $0x48] sm:$0xff]
    %v126 = vld [vmem:[%s3 + $0x50] sm:$0xff]
    %v127 = vld [vmem:[%s3 + $0x58] sm:$0xff]
    %v128 = vld [vmem:[%s3 + $0x60] sm:$0xff]
    %v129 = vld [vmem:[%s3 + $0x68] sm:$0xff]
    %v130 = vld [vmem:[%s3 + $0x70] sm:$0xff]
    %v131 = vld [vmem:[%s3 + $0x78] sm:$0xff]
    %v132 = vld [vmem:[%s4] sm:$0x1]
    %v134 = vlaneseq
    %v135 = vshrl.u32 %v134, 7
    %v136 = vsub.s32 0, %v135
    %v137 = vrot.slane %v132, %v136
    %139 = vmatprep.subr.mxu0 0.0
    %140 = vmatpush1.msra.mxu0 %v116
    %141 = vmatprep.subr.mxu0 0.0
    %142 = vmatpush1.msra.mxu0 %v117
    %143 = vmatprep.subr.mxu0 0.0
    %144 = vmatpush1.msra.mxu0 %v118
    %145 = vmatprep.subr.mxu0 0.0
    %146 = vmatpush1.msra.mxu0 %v119
    %147 = vmatprep.subr.mxu0 0.0
    %148 = vmatpush1.msra.mxu0 %v120
    %149 = vmatprep.subr.mxu0 0.0
    %150 = vmatpush1.msra.mxu0 %v121
    %151 = vmatprep.subr.mxu0 0.0
    %152 = vmatpush1.msra.mxu0 %v122
    %153 = vmatprep.subr.mxu0 0.0
    %154 = vmatpush1.msra.mxu0 %v123
    %155 = vmatprep.subr.mxu0 0.0
    %156 = vmatpush1.msra.mxu0 %v124
    %157 = vmatprep.subr.mxu0 0.0
    %158 = vmatpush1.msra.mxu0 %v125
    %159 = vmatprep.subr.mxu0 0.0
    %160 = vmatpush1.msra.mxu0 %v126
    %161 = vmatprep.subr.mxu0 0.0
    %162 = vmatpush1.msra.mxu0 %v127
    %163 = vmatprep.subr.mxu0 0.0
    %164 = vmatpush1.msra.mxu0 %v128
    %165 = vmatprep.subr.mxu0 0.0
    %166 = vmatpush1.msra.mxu0 %v129
    %167 = vmatprep.subr.mxu0 0.0
    %168 = vmatpush1.msra.mxu0 %v130
    %169 = vmatprep.subr.mxu0 0.0
    %170 = vmatpush1.msra.mxu0 %v131
    %171 = vmatprep.subr.mxu0 0.0
    %172 = vmatpush1.msra.mxu0 0.0
    %173 = vmatprep.subr.mxu0 0.0
    %174 = vmatpush1.msra.mxu0 0.0
    %175 = vmatprep.subr.mxu0 0.0
    %176 = vmatpush1.msra.mxu0 0.0
    %177 = vmatprep.subr.mxu0 0.0
    %178 = vmatpush1.msra.mxu0 0.0
    %179 = vmatprep.subr.mxu0 0.0
    %180 = vmatpush1.msra.mxu0 0.0
    %181 = vmatprep.subr.mxu0 0.0
    %182 = vmatpush1.msra.mxu0 0.0
    %183 = vmatprep.subr.mxu0 0.0
    %184 = vmatpush1.msra.mxu0 0.0
    %185 = vmatprep.subr.mxu0 0.0
    %186 = vmatpush1.msra.mxu0 0.0
    %187 = vmatprep.subr.mxu0 0.0
    %188 = vmatpush1.msra.mxu0 0.0
    %189 = vmatprep.subr.mxu0 0.0
    %190 = vmatpush1.msra.mxu0 0.0
    %191 = vmatprep.subr.mxu0 0.0
    %192 = vmatpush1.msra.mxu0 0.0
    %193 = vmatprep.subr.mxu0 0.0
    %194 = vmatpush1.msra.mxu0 0.0
    %195 = vmatprep.subr.mxu0 0.0
    %196 = vmatpush1.msra.mxu0 0.0
    %197 = vmatprep.subr.mxu0 0.0
    %198 = vmatpush1.msra.mxu0 0.0
    %199 = vmatprep.subr.mxu0 0.0
    %200 = vmatpush1.msra.mxu0 0.0
    %201 = vmatprep.subr.mxu0 0.0
    %202 = vmatpush1.msra.mxu0 0.0
    %203 = vmatprep.mubr.f32.mxu0 0.0
    %204 = vmatmul.mubr.f32.gmra.mrb[0].mxu0 %v114
    %v205 = vpop.f32.mrb[0].mxu0
    %v206 = vadd.f32 %v137, %v205
    %v207 = vpop.f32.mrb[0].mxu0
    %208 = vmatprep.mubr.f32.mxu0 0.0
    %209 = vmatmul.mubr.f32.gmra.mrb[0].mxu0 %v115
    %v210 = vpop.f32.mrb[0].mxu0
    %v211 = vadd.f32 %v137, %v210
    %v212 = vpop.f32.mrb[0].mxu0
    %213 = vdwg.mxu0
    %v214 = vlaneseq
    %v215 = vand.u32 %v214, 127
    %v216 = vmax.f32 %v206, 0.0
    %v217 = vmax.f32 %v211, 0.0
    %v218 = vand.u32 2147483647, %v206
    %v219 = vand.u32 2147483647, %v211
    %v220 = vsub.f32 0.0, %v218
    %v221 = vsub.f32 0.0, %v219
    %v222 = vmul.f32 %v220, 1.442695
    %v223 = vpow.pop %v222
    %v224 = vmul.f32 %v221, 1.442695
    %v225 = vpow.pop %v224
    %v226 = vadd.f32 %v223, 1.0
    %v227 = vlog2.pop %v226
    %v228 = vmul.f32 %v227, 0.6931472
    %v229 = vmul.f32 -0.5, %v223
    %v230 = vadd.f32 %v229, 1.0
    %v231 = vmul.f32 %v230, %v223
    %v232 = vand.u32 2147483647, %v223
    %vm233 = vcmp.lt.f32.partialorder %v232, 0.0004427343
    %v234 = vsel %vm233, %v231, %v228
    %v235 = vadd.f32 %v225, 1.0
    %v236 = vlog2.pop %v235
    %v237 = vmul.f32 %v236, 0.6931472
    %v238 = vmul.f32 -0.5, %v225
    %v239 = vadd.f32 %v238, 1.0
    %v240 = vmul.f32 %v239, %v225
    %v241 = vand.u32 2147483647, %v225
    %vm242 = vcmp.lt.f32.partialorder %v241, 0.0004427343
    %v243 = vsel %vm242, %v240, %v237
    %v244 = vadd.f32 %v216, %v234
    %v245 = vadd.f32 %v217, %v243
    %v246 = vadd.f32 %v244, 1e-08
    %v247 = vadd.f32 %v245, 1e-08
    %vm248 = vcmp.ge.s32.totalorder %v215, 8
    %v249 = vsel %vm248, %v246, %v206
    %v250 = vsel %vm248, %v247, %v211
    %251 = vst.msk [vmem:[#allocation2] sm:$0xff] %vm32, %v249
    %252 = vst.msk [vmem:[#allocation2 + $0x8] sm:$0xff] %vm32, %v250
    // Predicated region
    $region22: #{tpu_custom_call.1} parent=1 // pred_check
      _
    $region23: #{tpu_custom_call.1} parent=1 // pred_check_branch
      %254 = sbr.rel (0) target = $region25
    $region24: #{tpu_custom_call.1} parent=1 // pred_region
      %s256 = ssub.s32 256, 256
      %257 = vsyncadd [#allocation3], %s256
      %s258 = sshll.u32 [#allocation2], 4
      %s259 = int_to_ptr.vmem [resolvable:$true] %s258
      %264 = dma.vmem_to_hbm [thread:$0]  %s259, 256, %s5, [#allocation3], 128, 128, 8
    $region25: #{tpu_custom_call.1} parent=1 // pred_fallthru
      _
    // Predicated region
    $region26: #{tpu_custom_call.1} parent=1 // pred_check
      _
    $region27: #{tpu_custom_call.1} parent=1 // pred_check_branch
      %266 = sbr.rel (0) target = $region29
    $region28: #{tpu_custom_call.1} parent=1 // pred_region
      %267 = dma.done [#allocation3], 256
    $region29: #{tpu_custom_call.1} parent=1 // pred_fallthru
      _
    %268 = vsyncpa [#allocation3], 1

</llo_original>
